<compile_context>
chip_gen: v6e
topology: v6e:2x2x1
jax: 0.10.0
libtpu: 0.0.40
codegen_flags: <defaults>
</compile_context>

<pallas_src>
import numpy as np
import jax
import jax.numpy as jnp
from jax.experimental import pallas as pl
from jax.experimental.pallas import tpu as pltpu

EPS = 1e-5  # nn.BatchNorm1d default eps

_COMPILER_PARAMS = pltpu.CompilerParams(
    vmem_limit_bytes=32 * 1024 * 1024,   # safe on 64 MiB (v7x) and 128 MiB (v5e/v6e)
)


# ---------------- fused Pallas kernel ----------------

def _byol_fused_kernel(p_ref, gap_ref, bnm_ref,
                       cw_ref, cb_ref,
                       pw1_ref, pb1_ref, pg_ref, pbt_ref, pw2_ref, pb2_ref,
                       qw1_ref, qb1_ref, qg_ref, qbt_ref, qw2_ref, qb2_ref,
                       proj_ref, pred_ref):
    """conv(im2col matmul)+bias+ReLU+GAP -> projector MLP -> predictor MLP.

    p_ref:   (V*B*OH*OW, 9*Cin)  im2col patches, rows ordered (view, img, spatial)
    gap_ref: (V*B, V*B*OH*OW)    block-diagonal 1/(OH*OW) averaging matrix
    bnm_ref: (V*B, V*B)          block-diagonal 1/B per-view averaging matrix
    cw_ref:  (9*Cin, C), cb_ref: (1, C)
    *w1/b1/g/bt/w2/b2:           projector (p*) / predictor (q*) MLP params
    proj_ref, pred_ref: (V*B, P) outputs (lane-dense last dim)
    """
    f32, bf16 = jnp.float32, jnp.bfloat16

    # Backbone: one big matmul (no per-image loop / concat), bias+ReLU in f32,
    # global average pool as an MXU averaging matmul (keeps XLU/VPU slots free).
    y = jnp.dot(p_ref[...].astype(bf16), cw_ref[...].astype(bf16),
                preferred_element_type=f32) + cb_ref[...]
    y = jnp.maximum(y, 0.0)
    reps = jnp.dot(gap_ref[...], y, preferred_element_type=f32)       # (V*B, C)

    bn_mat = bnm_ref[...]

    def mlp(x, w1, b1, g, bt, w2, b2):
        # Linear -> BatchNorm1d (train-mode biased batch stats, per view via the
        # block-diagonal averaging matmul) -> ReLU -> Linear.
        h = jnp.dot(x.astype(bf16), w1[...].astype(bf16),
                    preferred_element_type=f32) + b1[...]
        mean = jnp.dot(bn_mat, h, preferred_element_type=f32)          # per-view mean, row-replicated
        var = jnp.dot(bn_mat, (h - mean) ** 2, preferred_element_type=f32)
        hn = (h - mean) * jax.lax.rsqrt(var + EPS)
        hn = hn * g[...] + bt[...]
        hn = jnp.maximum(hn, 0.0)
        return jnp.dot(hn.astype(bf16), w2[...].astype(bf16),
                       preferred_element_type=f32) + b2[...]

    projs = mlp(reps, pw1_ref, pb1_ref, pg_ref, pbt_ref, pw2_ref, pb2_ref)
    proj_ref[...] = projs
    pred_ref[...] = mlp(projs, qw1_ref, qb1_ref, qg_ref, qbt_ref, qw2_ref, qb2_ref)


# ---------------- wrappers ----------------

def _im2col(images):
    """images: (V, B, Cin, H, W) NCHW -> (V*B*OH*OW, 9*Cin) patches for a
    Conv2d(3x3, stride=2, pad=1), tap order (kh, kw, cin)."""
    V, B, Cin, H, W = images.shape
    x = jnp.transpose(images, (0, 1, 3, 4, 2))                 # -> NHWC per view
    OH = (H + 2 - 3) // 2 + 1
    OW = (W + 2 - 3) // 2 + 1
    xp = jnp.pad(x, ((0, 0), (0, 0), (1, 1), (1, 1), (0, 0)))
    taps = []
    for kh in range(3):
        for kw in range(3):
            taps.append(xp[:, :, kh:kh + 2 * OH:2, kw:kw + 2 * OW:2, :])
    p = jnp.concatenate(taps, axis=-1).reshape(V * B * OH * OW, 9 * Cin)
    return p, OH, OW


def _averaging_mats(V, B, OHW):
    """Block-diagonal averaging matrices for GAP and per-view BN batch stats."""
    VB = V * B
    gap = np.zeros((VB, VB * OHW), np.float32)
    for i in range(VB):
        gap[i, i * OHW:(i + 1) * OHW] = 1.0 / OHW
    bn = np.zeros((VB, VB), np.float32)
    for v in range(V):
        bn[v * B:(v + 1) * B, v * B:(v + 1) * B] = 1.0 / B
    return jnp.asarray(gap), jnp.asarray(bn)


def byol_forward(params, image_one, image_two):
    """Mirrors BYOL.forward(image_one, image_two) with use_momentum=True.

    The target encoder is a fresh deepcopy of the online encoder (identical
    parameters, no EMA step inside forward), so its projections equal the
    online projections; reuse them under stop_gradient instead of recomputing.
    """
    B = image_one.shape[0]
    images = jnp.stack([image_one, image_two], axis=0)          # (2, B, Cin, H, W)
    V = 2
    p, OH, OW = _im2col(images)                                 # (V*B*OH*OW, 9*Cin)
    gap_mat, bn_mat = _averaging_mats(V, B, OH * OW)

    proj_size = params["projector"][4].shape[1]
    VB = V * B

    projs, preds = pl.pallas_call(
        _byol_fused_kernel,
        out_shape=(jax.ShapeDtypeStruct((VB, proj_size), jnp.float32),
                   jax.ShapeDtypeStruct((VB, proj_size), jnp.float32)),
        compiler_params=_COMPILER_PARAMS,
    )(p, gap_mat, bn_mat, params["conv_w"], params["conv_b"],
      *params["projector"], *params["predictor"])

    online_pred_one, online_pred_two = preds[:B], preds[B:]
    target_proj_one = jax.lax.stop_gradient(projs[:B])
    target_proj_two = jax.lax.stop_gradient(projs[B:])
    return online_pred_one, online_pred_two, target_proj_one, target_proj_two


# ---------------- parameter init ----------------

def init_mlp_params(key, dim, hidden, out):
    k1, k2, k3, k4 = jax.random.split(key, 4)
    w1 = jax.random.normal(k1, (dim, hidden), jnp.float32) * (1.0 / jnp.sqrt(dim))
    b1 = jax.random.normal(k2, (1, hidden), jnp.float32) * 0.01
    g = jnp.ones((1, hidden), jnp.float32)    # BatchNorm1d gamma init
    bt = jnp.zeros((1, hidden), jnp.float32)  # BatchNorm1d beta init
    w2 = jax.random.normal(k3, (hidden, out), jnp.float32) * (1.0 / jnp.sqrt(hidden))
    b2 = jax.random.normal(k4, (1, out), jnp.float32) * 0.01
    return (w1, b1, g, bt, w2, b2)


def init_byol_params(key, cin=3, conv_c=128, proj_hidden=256, proj_size=128):
    # NOTE: a PyTorch conv weight (Cout, Cin, KH, KW) must be permuted to
    # (KH, KW, Cin, Cout) before flattening to match the (kh, kw, cin) tap order.
    kc, kcb, kp, kq = jax.random.split(key, 4)
    conv_w = jax.random.normal(kc, (9 * cin, conv_c), jnp.float32) * (1.0 / jnp.sqrt(9 * cin))
    conv_b = jax.random.normal(kcb, (1, conv_c), jnp.float32) * 0.01
    projector = init_mlp_params(kp, conv_c, proj_hidden, proj_size)
    predictor = init_mlp_params(kq, proj_size, proj_hidden, proj_size)
    return dict(conv_w=conv_w, conv_b=conv_b, projector=projector, predictor=predictor)


if __name__ == "__main__":
    key = jax.random.PRNGKey(0)
    kp, k1, k2 = jax.random.split(key, 3)

    B, CIN, IMG = 2, 3, 16
    CONV_C, HIDDEN, PROJ = 128, 256, 128   # lane-dense (multiples of 128)
    params = init_byol_params(kp, cin=CIN, conv_c=CONV_C,
                              proj_hidden=HIDDEN, proj_size=PROJ)

    image_one = jax.random.normal(k1, (B, CIN, IMG, IMG), jnp.float32)  # NCHW like PyTorch
    image_two = jax.random.normal(k2, (B, CIN, IMG, IMG), jnp.float32)

    fwd = jax.jit(byol_forward)
    outs = fwd(params, image_one, image_two)
    outs = jax.block_until_ready(outs)

    assert outs[0].shape == (B, PROJ) and outs[1].shape == (B, PROJ)
    assert outs[2].shape == (B, PROJ) and outs[3].shape == (B, PROJ)
    assert all(bool(jnp.all(jnp.isfinite(o))) for o in outs)
    print("KERNEL_OK")
</pallas_src>

<mosaic_0001>
module attributes {stable_mosaic.version = 11 : i64} {
  func.func @_byol_fused_kernel(%arg0: memref<256x27xf32, #tpu.memory_space<vmem>>, %arg1: memref<4x256xf32, #tpu.memory_space<vmem>>, %arg2: memref<4x4xf32, #tpu.memory_space<vmem>>, %arg3: memref<27x128xf32, #tpu.memory_space<vmem>>, %arg4: memref<1x128xf32, #tpu.memory_space<vmem>>, %arg5: memref<128x256xf32, #tpu.memory_space<vmem>>, %arg6: memref<1x256xf32, #tpu.memory_space<vmem>>, %arg7: memref<1x256xf32, #tpu.memory_space<vmem>>, %arg8: memref<1x256xf32, #tpu.memory_space<vmem>>, %arg9: memref<256x128xf32, #tpu.memory_space<vmem>>, %arg10: memref<1x128xf32, #tpu.memory_space<vmem>>, %arg11: memref<128x256xf32, #tpu.memory_space<vmem>>, %arg12: memref<1x256xf32, #tpu.memory_space<vmem>>, %arg13: memref<1x256xf32, #tpu.memory_space<vmem>>, %arg14: memref<1x256xf32, #tpu.memory_space<vmem>>, %arg15: memref<256x128xf32, #tpu.memory_space<vmem>>, %arg16: memref<1x128xf32, #tpu.memory_space<vmem>>, %arg17: memref<4x128xf32, #tpu.memory_space<vmem>>, %arg18: memref<4x128xf32, #tpu.memory_space<vmem>>) attributes {dimension_semantics = [], scalar_prefetch = 0 : i64, scratch_operands = 0 : i64, tpu.core_type = #tpu.core_type<tc>} {
    %c0 = arith.constant 0 : index
    %c0_0 = arith.constant 0 : index
    %0 = vector.load %arg0[%c0, %c0_0] : memref<256x27xf32, #tpu.memory_space<vmem>>, vector<256x27xf32>
    %1 = arith.truncf %0 : vector<256x27xf32> to vector<256x27xbf16>
    %c0_1 = arith.constant 0 : index
    %c0_2 = arith.constant 0 : index
    %2 = vector.load %arg3[%c0_1, %c0_2] : memref<27x128xf32, #tpu.memory_space<vmem>>, vector<27x128xf32>
    %3 = arith.truncf %2 : vector<27x128xf32> to vector<27x128xbf16>
    %cst = arith.constant dense<0.000000e+00> : vector<256x128xf32>
    %4 = tpu.matmul %1, %3, %cst {dimension_numbers = #tpu.dot_dimension_numbers<[1], [0], [0], [1], [0, 0, 1, 1], [], []>} : vector<256x27xbf16>, vector<27x128xbf16>, vector<256x128xf32> -> vector<256x128xf32>
    %c0_3 = arith.constant 0 : index
    %c0_4 = arith.constant 0 : index
    %5 = vector.load %arg4[%c0_3, %c0_4] : memref<1x128xf32, #tpu.memory_space<vmem>>, vector<1x128xf32>
    %6 = vector.broadcast %5 : vector<1x128xf32> to vector<256x128xf32>
    %7 = arith.addf %4, %6 : vector<256x128xf32>
    %cst_5 = arith.constant 0.000000e+00 : f32
    %8 = vector.broadcast %cst_5 : f32 to vector<256x128xf32>
    %9 = arith.maximumf %7, %8 : vector<256x128xf32>
    %c0_6 = arith.constant 0 : index
    %c0_7 = arith.constant 0 : index
    %10 = vector.load %arg1[%c0_6, %c0_7] : memref<4x256xf32, #tpu.memory_space<vmem>>, vector<4x256xf32>
    %cst_8 = arith.constant dense<0.000000e+00> : vector<4x128xf32>
    %11 = tpu.matmul %10, %9, %cst_8 {dimension_numbers = #tpu.dot_dimension_numbers<[1], [0], [0], [1], [0, 0, 1, 1], [], []>} : vector<4x256xf32>, vector<256x128xf32>, vector<4x128xf32> -> vector<4x128xf32>
    %c0_9 = arith.constant 0 : index
    %c0_10 = arith.constant 0 : index
    %12 = vector.load %arg2[%c0_9, %c0_10] : memref<4x4xf32, #tpu.memory_space<vmem>>, vector<4x4xf32>
    %13 = arith.truncf %11 : vector<4x128xf32> to vector<4x128xbf16>
    %c0_11 = arith.constant 0 : index
    %c0_12 = arith.constant 0 : index
    %14 = vector.load %arg5[%c0_11, %c0_12] : memref<128x256xf32, #tpu.memory_space<vmem>>, vector<128x256xf32>
    %15 = arith.truncf %14 : vector<128x256xf32> to vector<128x256xbf16>
    %cst_13 = arith.constant dense<0.000000e+00> : vector<4x256xf32>
    %16 = tpu.matmul %13, %15, %cst_13 {dimension_numbers = #tpu.dot_dimension_numbers<[1], [0], [0], [1], [0, 0, 1, 1], [], []>} : vector<4x128xbf16>, vector<128x256xbf16>, vector<4x256xf32> -> vector<4x256xf32>
    %c0_14 = arith.constant 0 : index
    %c0_15 = arith.constant 0 : index
    %17 = vector.load %arg6[%c0_14, %c0_15] : memref<1x256xf32, #tpu.memory_space<vmem>>, vector<1x256xf32>
    %18 = vector.broadcast %17 : vector<1x256xf32> to vector<4x256xf32>
    %19 = arith.addf %16, %18 : vector<4x256xf32>
    %cst_16 = arith.constant dense<0.000000e+00> : vector<4x256xf32>
    %20 = tpu.matmul %12, %19, %cst_16 {dimension_numbers = #tpu.dot_dimension_numbers<[1], [0], [0], [1], [0, 0, 1, 1], [], []>} : vector<4x4xf32>, vector<4x256xf32>, vector<4x256xf32> -> vector<4x256xf32>
    %21 = arith.subf %19, %20 : vector<4x256xf32>
    %22 = arith.mulf %21, %21 : vector<4x256xf32>
    %cst_17 = arith.constant dense<0.000000e+00> : vector<4x256xf32>
    %23 = tpu.matmul %12, %22, %cst_17 {dimension_numbers = #tpu.dot_dimension_numbers<[1], [0], [0], [1], [0, 0, 1, 1], [], []>} : vector<4x4xf32>, vector<4x256xf32>, vector<4x256xf32> -> vector<4x256xf32>
    %24 = arith.subf %19, %20 : vector<4x256xf32>
    %cst_18 = arith.constant 9.99999974E-6 : f32
    %25 = vector.broadcast %cst_18 : f32 to vector<4x256xf32>
    %26 = arith.addf %23, %25 : vector<4x256xf32>
    %27 = math.rsqrt %26 : vector<4x256xf32>
    %28 = arith.mulf %24, %27 : vector<4x256xf32>
    %c0_19 = arith.constant 0 : index
    %c0_20 = arith.constant 0 : index
    %29 = vector.load %arg7[%c0_19, %c0_20] : memref<1x256xf32, #tpu.memory_space<vmem>>, vector<1x256xf32>
    %30 = vector.broadcast %29 : vector<1x256xf32> to vector<4x256xf32>
    %31 = arith.mulf %28, %30 : vector<4x256xf32>
    %c0_21 = arith.constant 0 : index
    %c0_22 = arith.constant 0 : index
    %32 = vector.load %arg8[%c0_21, %c0_22] : memref<1x256xf32, #tpu.memory_space<vmem>>, vector<1x256xf32>
    %33 = vector.broadcast %32 : vector<1x256xf32> to vector<4x256xf32>
    %34 = arith.addf %31, %33 : vector<4x256xf32>
    %cst_23 = arith.constant 0.000000e+00 : f32
    %35 = vector.broadcast %cst_23 : f32 to vector<4x256xf32>
    %36 = arith.maximumf %34, %35 : vector<4x256xf32>
    %37 = arith.truncf %36 : vector<4x256xf32> to vector<4x256xbf16>
    %c0_24 = arith.constant 0 : index
    %c0_25 = arith.constant 0 : index
    %38 = vector.load %arg9[%c0_24, %c0_25] : memref<256x128xf32, #tpu.memory_space<vmem>>, vector<256x128xf32>
    %39 = arith.truncf %38 : vector<256x128xf32> to vector<256x128xbf16>
    %cst_26 = arith.constant dense<0.000000e+00> : vector<4x128xf32>
    %40 = tpu.matmul %37, %39, %cst_26 {dimension_numbers = #tpu.dot_dimension_numbers<[1], [0], [0], [1], [0, 0, 1, 1], [], []>} : vector<4x256xbf16>, vector<256x128xbf16>, vector<4x128xf32> -> vector<4x128xf32>
    %c0_27 = arith.constant 0 : index
    %c0_28 = arith.constant 0 : index
    %41 = vector.load %arg10[%c0_27, %c0_28] : memref<1x128xf32, #tpu.memory_space<vmem>>, vector<1x128xf32>
    %42 = vector.broadcast %41 : vector<1x128xf32> to vector<4x128xf32>
    %43 = arith.addf %40, %42 : vector<4x128xf32>
    %c0_29 = arith.constant 0 : index
    %c0_30 = arith.constant 0 : index
    %44 = vector.load %arg17[%c0_29, %c0_30] : memref<4x128xf32, #tpu.memory_space<vmem>>, vector<4x128xf32>
    tpu.vector_store %arg17[%c0_29, %c0_30], %43 {strides = array<i32>} : memref<4x128xf32, #tpu.memory_space<vmem>>, vector<4x128xf32>,
    %45 = arith.truncf %43 : vector<4x128xf32> to vector<4x128xbf16>
    %c0_31 = arith.constant 0 : index
    %c0_32 = arith.constant 0 : index
    %46 = vector.load %arg11[%c0_31, %c0_32] : memref<128x256xf32, #tpu.memory_space<vmem>>, vector<128x256xf32>
    %47 = arith.truncf %46 : vector<128x256xf32> to vector<128x256xbf16>
    %cst_33 = arith.constant dense<0.000000e+00> : vector<4x256xf32>
    %48 = tpu.matmul %45, %47, %cst_33 {dimension_numbers = #tpu.dot_dimension_numbers<[1], [0], [0], [1], [0, 0, 1, 1], [], []>} : vector<4x128xbf16>, vector<128x256xbf16>, vector<4x256xf32> -> vector<4x256xf32>
    %c0_34 = arith.constant 0 : index
    %c0_35 = arith.constant 0 : index
    %49 = vector.load %arg12[%c0_34, %c0_35] : memref<1x256xf32, #tpu.memory_space<vmem>>, vector<1x256xf32>
    %50 = vector.broadcast %49 : vector<1x256xf32> to vector<4x256xf32>
    %51 = arith.addf %48, %50 : vector<4x256xf32>
    %cst_36 = arith.constant dense<0.000000e+00> : vector<4x256xf32>
    %52 = tpu.matmul %12, %51, %cst_36 {dimension_numbers = #tpu.dot_dimension_numbers<[1], [0], [0], [1], [0, 0, 1, 1], [], []>} : vector<4x4xf32>, vector<4x256xf32>, vector<4x256xf32> -> vector<4x256xf32>
    %53 = arith.subf %51, %52 : vector<4x256xf32>
    %54 = arith.mulf %53, %53 : vector<4x256xf32>
    %cst_37 = arith.constant dense<0.000000e+00> : vector<4x256xf32>
    %55 = tpu.matmul %12, %54, %cst_37 {dimension_numbers = #tpu.dot_dimension_numbers<[1], [0], [0], [1], [0, 0, 1, 1], [], []>} : vector<4x4xf32>, vector<4x256xf32>, vector<4x256xf32> -> vector<4x256xf32>
    %56 = arith.subf %51, %52 : vector<4x256xf32>
    %cst_38 = arith.constant 9.99999974E-6 : f32
    %57 = vector.broadcast %cst_38 : f32 to vector<4x256xf32>
    %58 = arith.addf %55, %57 : vector<4x256xf32>
    %59 = math.rsqrt %58 : vector<4x256xf32>
    %60 = arith.mulf %56, %59 : vector<4x256xf32>
    %c0_39 = arith.constant 0 : index
    %c0_40 = arith.constant 0 : index
    %61 = vector.load %arg13[%c0_39, %c0_40] : memref<1x256xf32, #tpu.memory_space<vmem>>, vector<1x256xf32>
    %62 = vector.broadcast %61 : vector<1x256xf32> to vector<4x256xf32>
    %63 = arith.mulf %60, %62 : vector<4x256xf32>
    %c0_41 = arith.constant 0 : index
    %c0_42 = arith.constant 0 : index
    %64 = vector.load %arg14[%c0_41, %c0_42] : memref<1x256xf32, #tpu.memory_space<vmem>>, vector<1x256xf32>
    %65 = vector.broadcast %64 : vector<1x256xf32> to vector<4x256xf32>
    %66 = arith.addf %63, %65 : vector<4x256xf32>
    %cst_43 = arith.constant 0.000000e+00 : f32
    %67 = vector.broadcast %cst_43 : f32 to vector<4x256xf32>
    %68 = arith.maximumf %66, %67 : vector<4x256xf32>
    %69 = arith.truncf %68 : vector<4x256xf32> to vector<4x256xbf16>
    %c0_44 = arith.constant 0 : index
    %c0_45 = arith.constant 0 : index
    %70 = vector.load %arg15[%c0_44, %c0_45] : memref<256x128xf32, #tpu.memory_space<vmem>>, vector<256x128xf32>
    %71 = arith.truncf %70 : vector<256x128xf32> to vector<256x128xbf16>
    %cst_46 = arith.constant dense<0.000000e+00> : vector<4x128xf32>
    %72 = tpu.matmul %69, %71, %cst_46 {dimension_numbers = #tpu.dot_dimension_numbers<[1], [0], [0], [1], [0, 0, 1, 1], [], []>} : vector<4x256xbf16>, vector<256x128xbf16>, vector<4x128xf32> -> vector<4x128xf32>
    %c0_47 = arith.constant 0 : index
    %c0_48 = arith.constant 0 : index
    %73 = vector.load %arg16[%c0_47, %c0_48] : memref<1x128xf32, #tpu.memory_space<vmem>>, vector<1x128xf32>
    %74 = vector.broadcast %73 : vector<1x128xf32> to vector<4x128xf32>
    %75 = arith.addf %72, %74 : vector<4x128xf32>
    %c0_49 = arith.constant 0 : index
    %c0_50 = arith.constant 0 : index
    %76 = vector.load %arg18[%c0_49, %c0_50] : memref<4x128xf32, #tpu.memory_space<vmem>>, vector<4x128xf32>
    tpu.vector_store %arg18[%c0_49, %c0_50], %75 {strides = array<i32>} : memref<4x128xf32, #tpu.memory_space<vmem>>, vector<4x128xf32>,
    return
  }
}

</mosaic_0001>

<llo_original>
// kernel: byol_forward.1
$region0: #{byol_forward.1}
  #allocation0 [shape = 'u32[]', space=smem, size = 0x4, offset = 0x4, fixed_abs, tag = 'smem constant byte address 0x4 - core index']
  #allocation1 [shape = 'u32[144,128]{1,0:T(1,128)}', space=vmem, size = 0x12000, scoped, tag = 'internal scratch']
  %s0 = inlined_call_operand.vmem [shape: f32[256,27], index: 0, kind: input, shape index: {}]
  %s1 = inlined_call_operand.vmem [shape: f32[4,256], index: 1, kind: input, shape index: {}]
  %s2 = inlined_call_operand.vmem [shape: f32[4,4], index: 2, kind: input, shape index: {}]
  %s3 = inlined_call_operand.vmem [shape: f32[27,128], index: 3, kind: input, shape index: {}]
  %s4 = inlined_call_operand.vmem [shape: f32[1,128], index: 4, kind: input, shape index: {}]
  %s5 = inlined_call_operand.vmem [shape: f32[128,256], index: 5, kind: input, shape index: {}]
  %s6 = inlined_call_operand.vmem [shape: f32[1,256], index: 6, kind: input, shape index: {}]
  %s7 = inlined_call_operand.vmem [shape: f32[1,256], index: 7, kind: input, shape index: {}]
  %s8 = inlined_call_operand.vmem [shape: f32[1,256], index: 8, kind: input, shape index: {}]
  %s9 = inlined_call_operand.vmem [shape: f32[256,128], index: 9, kind: input, shape index: {}]
  %s10 = inlined_call_operand.vmem [shape: f32[1,128], index: 10, kind: input, shape index: {}]
  %s11 = inlined_call_operand.vmem [shape: f32[128,256], index: 11, kind: input, shape index: {}]
  %s12 = inlined_call_operand.vmem [shape: f32[1,256], index: 12, kind: input, shape index: {}]
  %s13 = inlined_call_operand.vmem [shape: f32[1,256], index: 13, kind: input, shape index: {}]
  %s14 = inlined_call_operand.vmem [shape: f32[1,256], index: 14, kind: input, shape index: {}]
  %s15 = inlined_call_operand.vmem [shape: f32[256,128], index: 15, kind: input, shape index: {}]
  %s16 = inlined_call_operand.vmem [shape: f32[1,128], index: 16, kind: input, shape index: {}]
  %s17 = inlined_call_operand.vmem [shape: f32[4,128], index: 17, kind: output, shape index: {0}]
  %s18 = inlined_call_operand.vmem [shape: f32[4,128], index: 18, kind: output, shape index: {1}]
  %19 = xla_tuple %s17, %s18
  %s20 = sld [smem:[#allocation0]]
  $region86: #{byol_forward.1} parent=0
    _
  %s22 = ssub.s32 1, %s20
  %s23 = scalar_select 0, %s22, %s20
  // Predicated region
  $region2: #{byol_forward.1} parent=0 // pred_check
    _
  $region3: #{byol_forward.1} parent=0 // pred_check_branch
    %25 = sbr.rel (0) target = $region5
  $region4: #{byol_forward.1} parent=0 // pred_region
    _
  $region5: #{byol_forward.1} parent=0 // pred_fallthru
    _
  // Predicated region
  $region6: #{byol_forward.1} parent=0 // pred_check
    _
  $region7: #{byol_forward.1} parent=0 // pred_check_branch
    %27 = sbr.rel (0) target = $region9
  $region8: #{byol_forward.1} parent=0 // pred_region
    _
  $region9: #{byol_forward.1} parent=0 // pred_fallthru
    _
  // Predicated region
  $region10: #{byol_forward.1} parent=0 // pred_check
    _
  $region11: #{byol_forward.1} parent=0 // pred_check_branch
    %29 = sbr.rel (0) target = $region13
  $region12: #{byol_forward.1} parent=0 // pred_region
    _
  $region13: #{byol_forward.1} parent=0 // pred_fallthru
    _
  // Predicated region
  $region14: #{byol_forward.1} parent=0 // pred_check
    _
  $region15: #{byol_forward.1} parent=0 // pred_check_branch
    %31 = sbr.rel (0) target = $region17
  $region16: #{byol_forward.1} parent=0 // pred_region
    _
  $region17: #{byol_forward.1} parent=0 // pred_fallthru
    _
  // Predicated region
  $region18: #{byol_forward.1} parent=0 // pred_check
    _
  $region19: #{byol_forward.1} parent=0 // pred_check_branch
    %33 = sbr.rel (0) target = $region21
  $region20: #{byol_forward.1} parent=0 // pred_region
    _
  $region21: #{byol_forward.1} parent=0 // pred_fallthru
    _
  // Predicated region
  $region22: #{byol_forward.1} parent=0 // pred_check
    _
  $region23: #{byol_forward.1} parent=0 // pred_check_branch
    %35 = sbr.rel (0) target = $region25
  $region24: #{byol_forward.1} parent=0 // pred_region
    _
  $region25: #{byol_forward.1} parent=0 // pred_fallthru
    _
  // Predicated region
  $region26: #{byol_forward.1} parent=0 // pred_check
    _
  $region27: #{byol_forward.1} parent=0 // pred_check_branch
    %37 = sbr.rel (0) target = $region29
  $region28: #{byol_forward.1} parent=0 // pred_region
    _
  $region29: #{byol_forward.1} parent=0 // pred_fallthru
    _
  // Predicated region
  $region30: #{byol_forward.1} parent=0 // pred_check
    _
  $region31: #{byol_forward.1} parent=0 // pred_check_branch
    %39 = sbr.rel (0) target = $region33
  $region32: #{byol_forward.1} parent=0 // pred_region
    _
  $region33: #{byol_forward.1} parent=0 // pred_fallthru
    _
  // Predicated region
  $region34: #{byol_forward.1} parent=0 // pred_check
    _
  $region35: #{byol_forward.1} parent=0 // pred_check_branch
    %41 = sbr.rel (0) target = $region37
  $region36: #{byol_forward.1} parent=0 // pred_region
    _
  $region37: #{byol_forward.1} parent=0 // pred_fallthru
    _
  // Predicated region
  $region38: #{byol_forward.1} parent=0 // pred_check
    _
  $region39: #{byol_forward.1} parent=0 // pred_check_branch
    %43 = sbr.rel (0) target = $region41
  $region40: #{byol_forward.1} parent=0 // pred_region
    _
  $region41: #{byol_forward.1} parent=0 // pred_fallthru
    _
  // Predicated region
  $region42: #{byol_forward.1} parent=0 // pred_check
    _
  $region43: #{byol_forward.1} parent=0 // pred_check_branch
    %45 = sbr.rel (0) target = $region45
  $region44: #{byol_forward.1} parent=0 // pred_region
    _
  $region45: #{byol_forward.1} parent=0 // pred_fallthru
    _
  // Predicated region
  $region46: #{byol_forward.1} parent=0 // pred_check
    _
  $region47: #{byol_forward.1} parent=0 // pred_check_branch
    %47 = sbr.rel (0) target = $region49
  $region48: #{byol_forward.1} parent=0 // pred_region
    _
  $region49: #{byol_forward.1} parent=0 // pred_fallthru
    _
  // Predicated region
  $region50: #{byol_forward.1} parent=0 // pred_check
    _
  $region51: #{byol_forward.1} parent=0 // pred_check_branch
    %49 = sbr.rel (0) target = $region53
  $region52: #{byol_forward.1} parent=0 // pred_region
    _
  $region53: #{byol_forward.1} parent=0 // pred_fallthru
    _
  // Predicated region
  $region54: #{byol_forward.1} parent=0 // pred_check
    _
  $region55: #{byol_forward.1} parent=0 // pred_check_branch
    %51 = sbr.rel (0) target = $region57
  $region56: #{byol_forward.1} parent=0 // pred_region
    _
  $region57: #{byol_forward.1} parent=0 // pred_fallthru
    _
  // Predicated region
  $region58: #{byol_forward.1} parent=0 // pred_check
    _
  $region59: #{byol_forward.1} parent=0 // pred_check_branch
    %53 = sbr.rel (0) target = $region61
  $region60: #{byol_forward.1} parent=0 // pred_region
    _
  $region61: #{byol_forward.1} parent=0 // pred_fallthru
    _
  // Predicated region
  $region62: #{byol_forward.1} parent=0 // pred_check
    _
  $region63: #{byol_forward.1} parent=0 // pred_check_branch
    %55 = sbr.rel (0) target = $region65
  $region64: #{byol_forward.1} parent=0 // pred_region
    _
  $region65: #{byol_forward.1} parent=0 // pred_fallthru
    _
  // Predicated region
  $region66: #{byol_forward.1} parent=0 // pred_check
    _
  $region67: #{byol_forward.1} parent=0 // pred_check_branch
    %57 = sbr.rel (0) target = $region69
  $region68: #{byol_forward.1} parent=0 // pred_region
    _
  $region69: #{byol_forward.1} parent=0 // pred_fallthru
    _
  %v59 = vld [vmem:[%s0] sm:$0xff]
  %v60 = vld [vmem:[%s0 + $0x8] sm:$0xff]
  %v61 = vld [vmem:[%s0 + $0x10] sm:$0xff]
  %v62 = vld [vmem:[%s0 + $0x18] sm:$0xff]
  %v63 = vld [vmem:[%s0 + $0x20] sm:$0xff]
  %v64 = vld [vmem:[%s0 + $0x28] sm:$0xff]
  %v65 = vld [vmem:[%s0 + $0x30] sm:$0xff]
  %v66 = vld [vmem:[%s0 + $0x38] sm:$0xff]
  %v67 = vld [vmem:[%s0 + $0x40] sm:$0xff]
  %v68 = vld [vmem:[%s0 + $0x48] sm:$0xff]
  %v69 = vld [vmem:[%s0 + $0x50] sm:$0xff]
  %v70 = vld [vmem:[%s0 + $0x58] sm:$0xff]
  %v71 = vld [vmem:[%s0 + $0x60] sm:$0xff]
  %v72 = vld [vmem:[%s0 + $0x68] sm:$0xff]
  %v73 = vld [vmem:[%s0 + $0x70] sm:$0xff]
  %v74 = vld [vmem:[%s0 + $0x78] sm:$0xff]
  %v75 = vld [vmem:[%s0 + $0x80] sm:$0xff]
  %v76 = vld [vmem:[%s0 + $0x88] sm:$0xff]
  %v77 = vld [vmem:[%s0 + $0x90] sm:$0xff]
  %v78 = vld [vmem:[%s0 + $0x98] sm:$0xff]
  %v79 = vld [vmem:[%s0 + $0xa0] sm:$0xff]
  %v80 = vld [vmem:[%s0 + $0xa8] sm:$0xff]
  %v81 = vld [vmem:[%s0 + $0xb0] sm:$0xff]
  %v82 = vld [vmem:[%s0 + $0xb8] sm:$0xff]
  %v83 = vld [vmem:[%s0 + $0xc0] sm:$0xff]
  %v84 = vld [vmem:[%s0 + $0xc8] sm:$0xff]
  %v85 = vld [vmem:[%s0 + $0xd0] sm:$0xff]
  %v86 = vld [vmem:[%s0 + $0xd8] sm:$0xff]
  %v87 = vld [vmem:[%s0 + $0xe0] sm:$0xff]
  %v88 = vld [vmem:[%s0 + $0xe8] sm:$0xff]
  %v89 = vld [vmem:[%s0 + $0xf0] sm:$0xff]
  %v90 = vld [vmem:[%s0 + $0xf8] sm:$0xff]
  %v91 = vpack.c.bf16 %v60, %v59
  %v92 = vpack.c.bf16 %v62, %v61
  %v93 = vpack.c.bf16 %v64, %v63
  %v94 = vpack.c.bf16 %v66, %v65
  %v95 = vpack.c.bf16 %v68, %v67
  %v96 = vpack.c.bf16 %v70, %v69
  %v97 = vpack.c.bf16 %v72, %v71
  %v98 = vpack.c.bf16 %v74, %v73
  %v99 = vpack.c.bf16 %v76, %v75
  %v100 = vpack.c.bf16 %v78, %v77
  %v101 = vpack.c.bf16 %v80, %v79
  %v102 = vpack.c.bf16 %v82, %v81
  %v103 = vpack.c.bf16 %v84, %v83
  %v104 = vpack.c.bf16 %v86, %v85
  %v105 = vpack.c.bf16 %v88, %v87
  %v106 = vpack.c.bf16 %v90, %v89
  %v107 = vld [vmem:[%s3] sm:$0xff]
  %v108 = vld [vmem:[%s3 + $0x8] sm:$0xff]
  %v109 = vld [vmem:[%s3 + $0x10] sm:$0xff]
  %v110 = vld [vmem:[%s3 + $0x18] sm:$0x7]
  %v111 = vpack.c.bf16 %v108, %v107
  %v112 = vpack.c.bf16 %v110, %v109
  %v113 = vld [vmem:[%s4] sm:$0x1]
  %v115 = vlaneseq
  %v116 = vshrl.u32 %v115, 7
  %v117 = vsub.s32 0, %v116
  %v118 = vrot.slane %v113, %v117
  %vm120 = vcmask 220160
  %v122 = vsel %vm120, %v91, 0
  %v125 = vsel %vm120, %v92, 0
  %v128 = vsel %vm120, %v93, 0
  %v131 = vsel %vm120, %v94, 0
  %v134 = vsel %vm120, %v95, 0
  %v137 = vsel %vm120, %v96, 0
  %v140 = vsel %vm120, %v97, 0
  %v143 = vsel %vm120, %v98, 0
  %v146 = vsel %vm120, %v99, 0
  %v149 = vsel %vm120, %v100, 0
  %v152 = vsel %vm120, %v101, 0
  %v155 = vsel %vm120, %v102, 0
  %v158 = vsel %vm120, %v103, 0
  %v161 = vsel %vm120, %v104, 0
  %v164 = vsel %vm120, %v105, 0
  %v167 = vsel %vm120, %v106, 0
  %vm169 = vcmask 1044480
  %vm170 = vcmask 1045504
  %v171 = vsel %vm169, 4294967295, 65535
  %v172 = vsel %vm170, %v171, 0
  %v174 = vand.u32 %v112, %v172
  %176 = vmatprep.subr.bf16.mxu0 0
  %177 = vmatpush1.bf16.msra.mxu0 0
  %178 = vmatprep.subr.bf16.mxu0 0
  %179 = vmatpush1.bf16.msra.mxu0 0
  %180 = vmatprep.subr.bf16.mxu0 0
  %181 = vmatpush1.bf16.msra.mxu0 0
  %182 = vmatprep.subr.bf16.mxu0 0
  %183 = vmatpush1.bf16.msra.mxu0 0
  %184 = vmatprep.subr.bf16.mxu0 0
  %185 = vmatpush1.bf16.msra.mxu0 0
  %186 = vmatprep.subr.bf16.mxu0 0
  %187 = vmatpush1.bf16.msra.mxu0 0
  %188 = vmatprep.subr.bf16.mxu0 0
  %189 = vmatpush1.bf16.msra.mxu0 %v174
  %190 = vmatprep.subr.bf16.mxu0 0
  %191 = vmatpush1.bf16.msra.mxu0 %v111
  %192 = vmatprep.subr.bf16.mxu0 0
  %193 = vmatpush2.bf16.msra.mxu0 0
  %194 = vmatprep.subr.bf16.mxu0 0
  %195 = vmatpush2.bf16.msra.mxu0 0
  %196 = vmatprep.subr.bf16.mxu0 0
  %197 = vmatpush2.bf16.msra.mxu0 0
  %198 = vmatprep.subr.bf16.mxu0 0
  %199 = vmatpush2.bf16.msra.mxu0 0
  %200 = vmatprep.subr.bf16.mxu0 0
  %201 = vmatpush2.bf16.msra.mxu0 0
  %202 = vmatprep.subr.bf16.mxu0 0
  %203 = vmatpush2.bf16.msra.mxu0 0
  %204 = vmatprep.subr.bf16.mxu0 0
  %205 = vmatpush2.bf16.msra.mxu0 0
  %206 = vmatprep.subr.bf16.mxu0 0
  %207 = vmatpush2.bf16.msra.mxu0 0
  %208 = vmatprep.mubr.bf16.mxu0 0
  %209 = vmatmul.mubr.bf16.gmra.mxu0 %v122
  %v210 = vpop.f32.mrf.mxu0
  %v211 = vadd.f32 %v118, %v210
  %v212 = vpop.f32.mrf.mxu0
  %v213 = vpop.f32.mrf.mxu0
  %v214 = vadd.f32 %v118, %v213
  %v215 = vpop.f32.mrf.mxu0
  %216 = vmatprep.mubr.bf16.mxu0 0
  %217 = vmatmul.mubr.bf16.gmra.mxu0 %v125
  %v218 = vpop.f32.mrf.mxu0
  %v219 = vadd.f32 %v118, %v218
  %v220 = vpop.f32.mrf.mxu0
  %v221 = vpop.f32.mrf.mxu0
  %v222 = vadd.f32 %v118, %v221
  %v223 = vpop.f32.mrf.mxu0
  %224 = vmatprep.mubr.bf16.mxu0 0
  %225 = vmatmul.mubr.bf16.gmra.mxu0 %v128
  %v226 = vpop.f32.mrf.mxu0
  %v227 = vadd.f32 %v118, %v226
  %v228 = vpop.f32.mrf.mxu0
  %v229 = vpop.f32.mrf.mxu0
  %v230 = vadd.f32 %v118, %v229
  %v231 = vpop.f32.mrf.mxu0
  %232 = vmatprep.mubr.bf16.mxu0 0
  %233 = vmatmul.mubr.bf16.gmra.mxu0 %v131
  %v234 = vpop.f32.mrf.mxu0
  %v235 = vadd.f32 %v118, %v234
  %v236 = vpop.f32.mrf.mxu0
  %v237 = vpop.f32.mrf.mxu0
  %v238 = vadd.f32 %v118, %v237
  %v239 = vpop.f32.mrf.mxu0
  %240 = vmatprep.mubr.bf16.mxu0 0
  %241 = vmatmul.mubr.bf16.gmra.mxu0 %v134
  %v242 = vpop.f32.mrf.mxu0
  %v243 = vadd.f32 %v118, %v242
  %v244 = vpop.f32.mrf.mxu0
  %v245 = vpop.f32.mrf.mxu0
  %v246 = vadd.f32 %v118, %v245
  %v247 = vpop.f32.mrf.mxu0
  %248 = vmatprep.mubr.bf16.mxu0 0
  %249 = vmatmul.mubr.bf16.gmra.mxu0 %v137
  %v250 = vpop.f32.mrf.mxu0
  %v251 = vadd.f32 %v118, %v250
  %v252 = vpop.f32.mrf.mxu0
  %v253 = vpop.f32.mrf.mxu0
  %v254 = vadd.f32 %v118, %v253
  %v255 = vpop.f32.mrf.mxu0
  %256 = vmatprep.mubr.bf16.mxu0 0
  %257 = vmatmul.mubr.bf16.gmra.mxu0 %v140
  %v258 = vpop.f32.mrf.mxu0
  %v259 = vadd.f32 %v118, %v258
  %v260 = vpop.f32.mrf.mxu0
  %v261 = vpop.f32.mrf.mxu0
  %v262 = vadd.f32 %v118, %v261
  %v263 = vpop.f32.mrf.mxu0
  %264 = vmatprep.mubr.bf16.mxu0 0
  %265 = vmatmul.mubr.bf16.gmra.mxu0 %v143
  %v266 = vpop.f32.mrf.mxu0
  %v267 = vadd.f32 %v118, %v266
  %v268 = vpop.f32.mrf.mxu0
  %v269 = vpop.f32.mrf.mxu0
  %v270 = vadd.f32 %v118, %v269
  %v271 = vpop.f32.mrf.mxu0
  %272 = vmatprep.mubr.bf16.mxu0 0
  %273 = vmatmul.mubr.bf16.gmra.mxu0 %v146
  %v274 = vpop.f32.mrf.mxu0
  %v275 = vadd.f32 %v118, %v274
  %v276 = vpop.f32.mrf.mxu0
  %v277 = vpop.f32.mrf.mxu0
  %v278 = vadd.f32 %v118, %v277
  %v279 = vpop.f32.mrf.mxu0
  %280 = vmatprep.mubr.bf16.mxu0 0
  %281 = vmatmul.mubr.bf16.gmra.mxu0 %v149
  %v282 = vpop.f32.mrf.mxu0
  %v283 = vadd.f32 %v118, %v282
  %v284 = vpop.f32.mrf.mxu0
  %v285 = vpop.f32.mrf.mxu0
  %v286 = vadd.f32 %v118, %v285
  %v287 = vpop.f32.mrf.mxu0
  %288 = vmatprep.mubr.bf16.mxu0 0
  %289 = vmatmul.mubr.bf16.gmra.mxu0 %v152
  %v290 = vpop.f32.mrf.mxu0
  %v291 = vadd.f32 %v118, %v290
  %v292 = vpop.f32.mrf.mxu0
  %v293 = vpop.f32.mrf.mxu0
  %v294 = vadd.f32 %v118, %v293
  %v295 = vpop.f32.mrf.mxu0
  %296 = vmatprep.mubr.bf16.mxu0 0
  %297 = vmatmul.mubr.bf16.gmra.mxu0 %v155
  %v298 = vpop.f32.mrf.mxu0
  %v299 = vadd.f32 %v118, %v298
  %v300 = vpop.f32.mrf.mxu0
  %v301 = vpop.f32.mrf.mxu0
  %v302 = vadd.f32 %v118, %v301
  %v303 = vpop.f32.mrf.mxu0
  %304 = vmatprep.mubr.bf16.mxu0 0
  %305 = vmatmul.mubr.bf16.gmra.mxu0 %v158
  %v306 = vpop.f32.mrf.mxu0
  %v307 = vadd.f32 %v118, %v306
  %v308 = vpop.f32.mrf.mxu0
  %v309 = vpop.f32.mrf.mxu0
  %v310 = vadd.f32 %v118, %v309
  %v311 = vpop.f32.mrf.mxu0
  %312 = vmatprep.mubr.bf16.mxu0 0
  %313 = vmatmul.mubr.bf16.gmra.mxu0 %v161
  %v314 = vpop.f32.mrf.mxu0
  %v315 = vadd.f32 %v118, %v314
  %v316 = vpop.f32.mrf.mxu0
  %v317 = vpop.f32.mrf.mxu0
  %v318 = vadd.f32 %v118, %v317
  %v319 = vpop.f32.mrf.mxu0
  %320 = vmatprep.mubr.bf16.mxu0 0
  %321 = vmatmul.mubr.bf16.gmra.mxu0 %v164
  %v322 = vpop.f32.mrf.mxu0
  %v323 = vadd.f32 %v118, %v322
  %v324 = vpop.f32.mrf.mxu0
  %v325 = vpop.f32.mrf.mxu0
  %v326 = vadd.f32 %v118, %v325
  %v327 = vpop.f32.mrf.mxu0
  %328 = vmatprep.mubr.bf16.mxu0 0
  %329 = vmatmul.mubr.bf16.gmra.mxu0 %v167
  %v330 = vpop.f32.mrf.mxu0
  %v331 = vadd.f32 %v118, %v330
  %v332 = vpop.f32.mrf.mxu0
  %v333 = vpop.f32.mrf.mxu0
  %v334 = vadd.f32 %v118, %v333
  %v335 = vpop.f32.mrf.mxu0
  %336 = vdwg.mxu0
  %v337 = vmax.f32 %v211, 0.0
  %v338 = vmax.f32 %v214, 0.0
  %v339 = vmax.f32 %v219, 0.0
  %v340 = vmax.f32 %v222, 0.0
  %v341 = vmax.f32 %v227, 0.0
  %v342 = vmax.f32 %v230, 0.0
  %v343 = vmax.f32 %v235, 0.0
  %v344 = vmax.f32 %v238, 0.0
  %v345 = vmax.f32 %v243, 0.0
  %v346 = vmax.f32 %v246, 0.0
  %v347 = vmax.f32 %v251, 0.0
  %v348 = vmax.f32 %v254, 0.0
  %v349 = vmax.f32 %v259, 0.0
  %v350 = vmax.f32 %v262, 0.0
  %v351 = vmax.f32 %v267, 0.0
  %v352 = vmax.f32 %v270, 0.0
  %v353 = vmax.f32 %v275, 0.0
  %v354 = vmax.f32 %v278, 0.0
  %v355 = vmax.f32 %v283, 0.0
  %v356 = vmax.f32 %v286, 0.0
  %v357 = vmax.f32 %v291, 0.0
  %v358 = vmax.f32 %v294, 0.0
  %v359 = vmax.f32 %v299, 0.0
  %v360 = vmax.f32 %v302, 0.0
  %v361 = vmax.f32 %v307, 0.0
  %v362 = vmax.f32 %v310, 0.0
  %v363 = vmax.f32 %v315, 0.0
  %v364 = vmax.f32 %v318, 0.0
  %v365 = vmax.f32 %v323, 0.0
  %v366 = vmax.f32 %v326, 0.0
  %v367 = vmax.f32 %v331, 0.0
  %v368 = vmax.f32 %v334, 0.0
  %v369 = vld [vmem:[%s1] sm:$0xff]
  %v371 = vcombine.high %v369, %v369
  %373 = vmatprep.subr.mxu0 0.0
  %374 = vmatpush1.msra.mxu0 %v352
  %375 = vmatprep.subr.mxu0 0.0
  %376 = vmatpush1.msra.mxu0 %v351
  %377 = vmatprep.subr.mxu0 0.0
  %378 = vmatpush1.msra.mxu0 %v350
  %379 = vmatprep.subr.mxu0 0.0
  %380 = vmatpush1.msra.mxu0 %v349
  %381 = vmatprep.subr.mxu0 0.0
  %382 = vmatpush1.msra.mxu0 %v348
  %383 = vmatprep.subr.mxu0 0.0
  %384 = vmatpush1.msra.mxu0 %v347
  %385 = vmatprep.subr.mxu0 0.0
  %386 = vmatpush1.msra.mxu0 %v346
  %387 = vmatprep.subr.mxu0 0.0
  %388 = vmatpush1.msra.mxu0 %v345
  %389 = vmatprep.subr.mxu0 0.0
  %390 = vmatpush1.msra.mxu0 %v344
  %391 = vmatprep.subr.mxu0 0.0
  %392 = vmatpush1.msra.mxu0 %v343
  %393 = vmatprep.subr.mxu0 0.0
  %394 = vmatpush1.msra.mxu0 %v342
  %395 = vmatprep.subr.mxu0 0.0
  %396 = vmatpush1.msra.mxu0 %v341
  %397 = vmatprep.subr.mxu0 0.0
  %398 = vmatpush1.msra.mxu0 %v340
  %399 = vmatprep.subr.mxu0 0.0
  %400 = vmatpush1.msra.mxu0 %v339
  %401 = vmatprep.subr.mxu0 0.0
  %402 = vmatpush1.msra.mxu0 %v338
  %403 = vmatprep.subr.mxu0 0.0
  %404 = vmatpush1.msra.mxu0 %v337
  %405 = vmatprep.subr.mxu0 0.0
  %406 = vmatpush2.msra.mxu0 %v368
  %407 = vmatprep.subr.mxu0 0.0
  %408 = vmatpush2.msra.mxu0 %v367
  %409 = vmatprep.subr.mxu0 0.0
  %410 = vmatpush2.msra.mxu0 %v366
  %411 = vmatprep.subr.mxu0 0.0
  %412 = vmatpush2.msra.mxu0 %v365
  %413 = vmatprep.subr.mxu0 0.0
  %414 = vmatpush2.msra.mxu0 %v364
  %415 = vmatprep.subr.mxu0 0.0
  %416 = vmatpush2.msra.mxu0 %v363
  %417 = vmatprep.subr.mxu0 0.0
  %418 = vmatpush2.msra.mxu0 %v362
  %419 = vmatprep.subr.mxu0 0.0
  %420 = vmatpush2.msra.mxu0 %v361
  %421 = vmatprep.subr.mxu0 0.0
  %422 = vmatpush2.msra.mxu0 %v360
  %423 = vmatprep.subr.mxu0 0.0
  %424 = vmatpush2.msra.mxu0 %v359
  %425 = vmatprep.subr.mxu0 0.0
  %426 = vmatpush2.msra.mxu0 %v358
  %427 = vmatprep.subr.mxu0 0.0
  %428 = vmatpush2.msra.mxu0 %v357
  %429 = vmatprep.subr.mxu0 0.0
  %430 = vmatpush2.msra.mxu0 %v356
  %431 = vmatprep.subr.mxu0 0.0
  %432 = vmatpush2.msra.mxu0 %v355
  %433 = vmatprep.subr.mxu0 0.0
  %434 = vmatpush2.msra.mxu0 %v354
  %435 = vmatprep.subr.mxu0 0.0
  %436 = vmatpush2.msra.mxu0 %v353
  %437 = vmatprep.mubr.f32.mxu0 %v371
  %438 = vmatmul.mubr.f32.gmra.mxu0 %v369
  %v439 = vpop.f32.mrf.mxu0
  %v440 = vadd.f32 0.0, %v439
  %v441 = vpop.f32.mrf.mxu0
  %442 = vdwg.mxu0
  %v443 = vld [vmem:[%s2] sm:$0xf]
  %v444 = vpack.c.bf16 %v440, %v440
  %v445 = vld [vmem:[%s5] sm:$0xff]
  %v446 = vld [vmem:[%s5 + $0x8] sm:$0xff]
  %v447 = vld [vmem:[%s5 + $0x10] sm:$0xff]
  %v448 = vld [vmem:[%s5 + $0x18] sm:$0xff]
  %v449 = vld [vmem:[%s5 + $0x20] sm:$0xff]
  %v450 = vld [vmem:[%s5 + $0x28] sm:$0xff]
  %v451 = vld [vmem:[%s5 + $0x30] sm:$0xff]
  %v452 = vld [vmem:[%s5 + $0x38] sm:$0xff]
  %v453 = vld [vmem:[%s5 + $0x40] sm:$0xff]
  %v454 = vld [vmem:[%s5 + $0x48] sm:$0xff]
  %v455 = vld [vmem:[%s5 + $0x50] sm:$0xff]
  %v456 = vld [vmem:[%s5 + $0x58] sm:$0xff]
  %v457 = vld [vmem:[%s5 + $0x60] sm:$0xff]
  %v458 = vld [vmem:[%s5 + $0x68] sm:$0xff]
  %v459 = vld [vmem:[%s5 + $0x70] sm:$0xff]
  %v460 = vld [vmem:[%s5 + $0x78] sm:$0xff]
  %v461 = vld [vmem:[%s5 + $0x80] sm:$0xff]
  %v462 = vld [vmem:[%s5 + $0x88] sm:$0xff]
  %v463 = vld [vmem:[%s5 + $0x90] sm:$0xff]
  %v464 = vld [vmem:[%s5 + $0x98] sm:$0xff]
  %v465 = vld [vmem:[%s5 + $0xa0] sm:$0xff]
  %v466 = vld [vmem:[%s5 + $0xa8] sm:$0xff]
  %v467 = vld [vmem:[%s5 + $0xb0] sm:$0xff]
  %v468 = vld [vmem:[%s5 + $0xb8] sm:$0xff]
  %v469 = vld [vmem:[%s5 + $0xc0] sm:$0xff]
  %v470 = vld [vmem:[%s5 + $0xc8] sm:$0xff]
  %v471 = vld [vmem:[%s5 + $0xd0] sm:$0xff]
  %v472 = vld [vmem:[%s5 + $0xd8] sm:$0xff]
  %v473 = vld [vmem:[%s5 + $0xe0] sm:$0xff]
  %v474 = vld [vmem:[%s5 + $0xe8] sm:$0xff]
  %v475 = vld [vmem:[%s5 + $0xf0] sm:$0xff]
  %v476 = vld [vmem:[%s5 + $0xf8] sm:$0xff]
  %v477 = vpack.c.bf16 %v447, %v445
  %v478 = vpack.c.bf16 %v448, %v446
  %v479 = vpack.c.bf16 %v451, %v449
  %v480 = vpack.c.bf16 %v452, %v450
  %v481 = vpack.c.bf16 %v455, %v453
  %v482 = vpack.c.bf16 %v456, %v454
  %v483 = vpack.c.bf16 %v459, %v457
  %v484 = vpack.c.bf16 %v460, %v458
  %v485 = vpack.c.bf16 %v463, %v461
  %v486 = vpack.c.bf16 %v464, %v462
  %v487 = vpack.c.bf16 %v467, %v465
  %v488 = vpack.c.bf16 %v468, %v466
  %v489 = vpack.c.bf16 %v471, %v469
  %v490 = vpack.c.bf16 %v472, %v470
  %v491 = vpack.c.bf16 %v475, %v473
  %v492 = vpack.c.bf16 %v476, %v474
  %v493 = vld [vmem:[%s6] sm:$0x3]
  %v495 = vlaneseq
  %v496 = vshrl.u32 %v495, 7
  %v497 = vsub.s32 0, %v496
  %v498 = vrot.slane %v493, %v497
  %v499 = vlaneseq
  %v500 = vshrl.u32 %v499, 7
  %v501 = vsub.s32 1, %v500
  %v502 = vrot.slane %v493, %v501
  %505 = vmatprep.subr.bf16.mxu0 %v492
  %506 = vmatpush1.bf16.msra.mxu0 %v491
  %507 = vmatprep.subr.bf16.mxu0 %v490
  %508 = vmatpush1.bf16.msra.mxu0 %v489
  %509 = vmatprep.subr.bf16.mxu0 %v488
  %510 = vmatpush1.bf16.msra.mxu0 %v487
  %511 = vmatprep.subr.bf16.mxu0 %v486
  %512 = vmatpush1.bf16.msra.mxu0 %v485
  %513 = vmatprep.subr.bf16.mxu0 %v484
  %514 = vmatpush1.bf16.msra.mxu0 %v483
  %515 = vmatprep.subr.bf16.mxu0 %v482
  %516 = vmatpush1.bf16.msra.mxu0 %v481
  %517 = vmatprep.subr.bf16.mxu0 %v480
  %518 = vmatpush1.bf16.msra.mxu0 %v479
  %519 = vmatprep.subr.bf16.mxu0 %v478
  %520 = vmatpush1.bf16.msra.mxu0 %v477
  %521 = vmatprep.subr.bf16.mxu0 0
  %522 = vmatpush2.bf16.msra.mxu0 0
  %523 = vmatprep.subr.bf16.mxu0 0
  %524 = vmatpush2.bf16.msra.mxu0 0
  %525 = vmatprep.subr.bf16.mxu0 0
  %526 = vmatpush2.bf16.msra.mxu0 0
  %527 = vmatprep.subr.bf16.mxu0 0
  %528 = vmatpush2.bf16.msra.mxu0 0
  %529 = vmatprep.subr.bf16.mxu0 0
  %530 = vmatpush2.bf16.msra.mxu0 0
  %531 = vmatprep.subr.bf16.mxu0 0
  %532 = vmatpush2.bf16.msra.mxu0 0
  %533 = vmatprep.subr.bf16.mxu0 0
  %534 = vmatpush2.bf16.msra.mxu0 0
  %535 = vmatprep.subr.bf16.mxu0 0
  %536 = vmatpush2.bf16.msra.mxu0 0
  %537 = vmatprep.mubr.bf16.mxu0 0
  %538 = vmatmul.mubr.bf16.gmra.mxu0 %v444
  %v539 = vpop.f32.mrf.mxu0
  %v540 = vadd.f32 %v498, %v539
  %v541 = vpop.f32.mrf.mxu0
  %v542 = vadd.f32 %v502, %v541
  %v543 = vpop.f32.mrf.mxu0
  %v544 = vpop.f32.mrf.mxu0
  %545 = vdwg.mxu0
  %vm546 = vcmask 31744
  %v548 = vsel %vm546, %v443, 0
  %vm550 = vcmask 1043456
  %v552 = vsel %vm550, %v540, 0
  %v555 = vsel %vm550, %v542, 0
  %557 = vmatprep.subr.mxu0 0.0
  %558 = vmatpush1.msra.mxu0 0.0
  %559 = vmatprep.subr.mxu0 0.0
  %560 = vmatpush1.msra.mxu0 0.0
  %561 = vmatprep.subr.mxu0 0.0
  %562 = vmatpush1.msra.mxu0 0.0
  %563 = vmatprep.subr.mxu0 0.0
  %564 = vmatpush1.msra.mxu0 0.0
  %565 = vmatprep.subr.mxu0 0.0
  %566 = vmatpush1.msra.mxu0 0.0
  %567 = vmatprep.subr.mxu0 0.0
  %568 = vmatpush1.msra.mxu0 0.0
  %569 = vmatprep.subr.mxu0 0.0
  %570 = vmatpush1.msra.mxu0 0.0
  %571 = vmatprep.subr.mxu0 0.0
  %572 = vmatpush1.msra.mxu0 0.0
  %573 = vmatprep.subr.mxu0 0.0
  %574 = vmatpush1.msra.mxu0 0.0
  %575 = vmatprep.subr.mxu0 0.0
  %576 = vmatpush1.msra.mxu0 0.0
  %577 = vmatprep.subr.mxu0 0.0
  %578 = vmatpush1.msra.mxu0 0.0
  %579 = vmatprep.subr.mxu0 0.0
  %580 = vmatpush1.msra.mxu0 0.0
  %581 = vmatprep.subr.mxu0 0.0
  %582 = vmatpush1.msra.mxu0 0.0
  %583 = vmatprep.subr.mxu0 0.0
  %584 = vmatpush1.msra.mxu0 0.0
  %585 = vmatprep.subr.mxu0 0.0
  %586 = vmatpush1.msra.mxu0 0.0
  %587 = vmatprep.subr.mxu0 %v555
  %588 = vmatpush1.msra.mxu0 %v552
  %589 = vmatprep.subr.mxu0 0.0
  %590 = vmatpush2.msra.mxu0 0.0
  %591 = vmatprep.subr.mxu0 0.0
  %592 = vmatpush2.msra.mxu0 0.0
  %593 = vmatprep.subr.mxu0 0.0
  %594 = vmatpush2.msra.mxu0 0.0
  %595 = vmatprep.subr.mxu0 0.0
  %596 = vmatpush2.msra.mxu0 0.0
  %597 = vmatprep.subr.mxu0 0.0
  %598 = vmatpush2.msra.mxu0 0.0
  %599 = vmatprep.subr.mxu0 0.0
  %600 = vmatpush2.msra.mxu0 0.0
  %601 = vmatprep.subr.mxu0 0.0
  %602 = vmatpush2.msra.mxu0 0.0
  %603 = vmatprep.subr.mxu0 0.0
  %604 = vmatpush2.msra.mxu0 0.0
  %605 = vmatprep.subr.mxu0 0.0
  %606 = vmatpush2.msra.mxu0 0.0
  %607 = vmatprep.subr.mxu0 0.0
  %608 = vmatpush2.msra.mxu0 0.0
  %609 = vmatprep.subr.mxu0 0.0
  %610 = vmatpush2.msra.mxu0 0.0
  %611 = vmatprep.subr.mxu0 0.0
  %612 = vmatpush2.msra.mxu0 0.0
  %613 = vmatprep.subr.mxu0 0.0
  %614 = vmatpush2.msra.mxu0 0.0
  %615 = vmatprep.subr.mxu0 0.0
  %616 = vmatpush2.msra.mxu0 0.0
  %617 = vmatprep.subr.mxu0 0.0
  %618 = vmatpush2.msra.mxu0 0.0
  %619 = vmatprep.subr.mxu0 0.0
  %620 = vmatpush2.msra.mxu0 0.0
  %621 = vmatprep.mubr.f32.mxu0 0.0
  %622 = vmatmul.mubr.f32.gmra.mxu0 %v548
  %v623 = vpop.f32.mrf.mxu0
  %v624 = vadd.f32 0.0, %v623
  %v625 = vpop.f32.mrf.mxu0
  %v626 = vadd.f32 0.0, %v625
  %627 = vdwg.mxu0
  %v628 = vsub.f32 %v540, %v624
  %v629 = vsub.f32 %v542, %v626
  %v630 = vmul.f32 %v628, %v628
  %v631 = vmul.f32 %v629, %v629
  %v633 = vsel %vm550, %v630, 0
  %v636 = vsel %vm550, %v631, 0
  %638 = vmatprep.subr.mxu0 0.0
  %639 = vmatpush1.msra.mxu0 0.0
  %640 = vmatprep.subr.mxu0 0.0
  %641 = vmatpush1.msra.mxu0 0.0
  %642 = vmatprep.subr.mxu0 0.0
  %643 = vmatpush1.msra.mxu0 0.0
  %644 = vmatprep.subr.mxu0 0.0
  %645 = vmatpush1.msra.mxu0 0.0
  %646 = vmatprep.subr.mxu0 0.0
  %647 = vmatpush1.msra.mxu0 0.0
  %648 = vmatprep.subr.mxu0 0.0
  %649 = vmatpush1.msra.mxu0 0.0
  %650 = vmatprep.subr.mxu0 0.0
  %651 = vmatpush1.msra.mxu0 0.0
  %652 = vmatprep.subr.mxu0 0.0
  %653 = vmatpush1.msra.mxu0 0.0
  %654 = vmatprep.subr.mxu0 0.0
  %655 = vmatpush1.msra.mxu0 0.0
  %656 = vmatprep.subr.mxu0 0.0
  %657 = vmatpush1.msra.mxu0 0.0
  %658 = vmatprep.subr.mxu0 0.0
  %659 = vmatpush1.msra.mxu0 0.0
  %660 = vmatprep.subr.mxu0 0.0
  %661 = vmatpush1.msra.mxu0 0.0
  %662 = vmatprep.subr.mxu0 0.0
  %663 = vmatpush1.msra.mxu0 0.0
  %664 = vmatprep.subr.mxu0 0.0
  %665 = vmatpush1.msra.mxu0 0.0
  %666 = vmatprep.subr.mxu0 0.0
  %667 = vmatpush1.msra.mxu0 0.0
  %668 = vmatprep.subr.mxu0 %v636
  %669 = vmatpush1.msra.mxu0 %v633
  %670 = vmatprep.subr.mxu0 0.0
  %671 = vmatpush2.msra.mxu0 0.0
  %672 = vmatprep.subr.mxu0 0.0
  %673 = vmatpush2.msra.mxu0 0.0
  %674 = vmatprep.subr.mxu0 0.0
  %675 = vmatpush2.msra.mxu0 0.0
  %676 = vmatprep.subr.mxu0 0.0
  %677 = vmatpush2.msra.mxu0 0.0
  %678 = vmatprep.subr.mxu0 0.0
  %679 = vmatpush2.msra.mxu0 0.0
  %680 = vmatprep.subr.mxu0 0.0
  %681 = vmatpush2.msra.mxu0 0.0
  %682 = vmatprep.subr.mxu0 0.0
  %683 = vmatpush2.msra.mxu0 0.0
  %684 = vmatprep.subr.mxu0 0.0
  %685 = vmatpush2.msra.mxu0 0.0
  %686 = vmatprep.subr.mxu0 0.0
  %687 = vmatpush2.msra.mxu0 0.0
  %688 = vmatprep.subr.mxu0 0.0
  %689 = vmatpush2.msra.mxu0 0.0
  %690 = vmatprep.subr.mxu0 0.0
  %691 = vmatpush2.msra.mxu0 0.0
  %692 = vmatprep.subr.mxu0 0.0
  %693 = vmatpush2.msra.mxu0 0.0
  %694 = vmatprep.subr.mxu0 0.0
  %695 = vmatpush2.msra.mxu0 0.0
  %696 = vmatprep.subr.mxu0 0.0
  %697 = vmatpush2.msra.mxu0 0.0
  %698 = vmatprep.subr.mxu0 0.0
  %699 = vmatpush2.msra.mxu0 0.0
  %700 = vmatprep.subr.mxu0 0.0
  %701 = vmatpush2.msra.mxu0 0.0
  %702 = vmatprep.mubr.f32.mxu0 0.0
  %703 = vmatmul.mubr.f32.gmra.mxu0 %v548
  %v704 = vpop.f32.mrf.mxu0
  %v705 = vadd.f32 1e-05, %v704
  %v706 = vpop.f32.mrf.mxu0
  %v707 = vadd.f32 1e-05, %v706
  %708 = vdwg.mxu0
  %v709 = vrsqrt.pop %v705
  %v710 = vrsqrt.pop %v707
  %v711 = vmul.f32 %v628, %v709
  %v712 = vmul.f32 %v629, %v710
  %v713 = vld [vmem:[%s7] sm:$0x3]
  %v715 = vlaneseq
  %v716 = vshrl.u32 %v715, 7
  %v717 = vsub.s32 0, %v716
  %v718 = vrot.slane %v713, %v717
  %v719 = vlaneseq
  %v720 = vshrl.u32 %v719, 7
  %v721 = vsub.s32 1, %v720
  %v722 = vrot.slane %v713, %v721
  %v725 = vmul.f32 %v711, %v718
  %v726 = vmul.f32 %v712, %v722
  %v727 = vld [vmem:[%s8] sm:$0x3]
  %v729 = vlaneseq
  %v730 = vshrl.u32 %v729, 7
  %v731 = vsub.s32 0, %v730
  %v732 = vrot.slane %v727, %v731
  %v733 = vlaneseq
  %v734 = vshrl.u32 %v733, 7
  %v735 = vsub.s32 1, %v734
  %v736 = vrot.slane %v727, %v735
  %v739 = vadd.f32 %v725, %v732
  %v740 = vadd.f32 %v726, %v736
  %v741 = vmax.f32 %v739, 0.0
  %v742 = vmax.f32 %v740, 0.0
  %v743 = vpack.c.bf16 %v741, %v741
  %v744 = vpack.c.bf16 %v742, %v742
  %v745 = vld [vmem:[%s9] sm:$0xff]
  %v746 = vld [vmem:[%s9 + $0x8] sm:$0xff]
  %v747 = vld [vmem:[%s9 + $0x10] sm:$0xff]
  %v748 = vld [vmem:[%s9 + $0x18] sm:$0xff]
  %v749 = vld [vmem:[%s9 + $0x20] sm:$0xff]
  %v750 = vld [vmem:[%s9 + $0x28] sm:$0xff]
  %v751 = vld [vmem:[%s9 + $0x30] sm:$0xff]
  %v752 = vld [vmem:[%s9 + $0x38] sm:$0xff]
  %v753 = vld [vmem:[%s9 + $0x40] sm:$0xff]
  %v754 = vld [vmem:[%s9 + $0x48] sm:$0xff]
  %v755 = vld [vmem:[%s9 + $0x50] sm:$0xff]
  %v756 = vld [vmem:[%s9 + $0x58] sm:$0xff]
  %v757 = vld [vmem:[%s9 + $0x60] sm:$0xff]
  %v758 = vld [vmem:[%s9 + $0x68] sm:$0xff]
  %v759 = vld [vmem:[%s9 + $0x70] sm:$0xff]
  %v760 = vld [vmem:[%s9 + $0x78] sm:$0xff]
  %v761 = vld [vmem:[%s9 + $0x80] sm:$0xff]
  %v762 = vld [vmem:[%s9 + $0x88] sm:$0xff]
  %v763 = vld [vmem:[%s9 + $0x90] sm:$0xff]
  %v764 = vld [vmem:[%s9 + $0x98] sm:$0xff]
  %v765 = vld [vmem:[%s9 + $0xa0] sm:$0xff]
  %v766 = vld [vmem:[%s9 + $0xa8] sm:$0xff]
  %v767 = vld [vmem:[%s9 + $0xb0] sm:$0xff]
  %v768 = vld [vmem:[%s9 + $0xb8] sm:$0xff]
  %v769 = vld [vmem:[%s9 + $0xc0] sm:$0xff]
  %v770 = vld [vmem:[%s9 + $0xc8] sm:$0xff]
  %v771 = vld [vmem:[%s9 + $0xd0] sm:$0xff]
  %v772 = vld [vmem:[%s9 + $0xd8] sm:$0xff]
  %v773 = vld [vmem:[%s9 + $0xe0] sm:$0xff]
  %v774 = vld [vmem:[%s9 + $0xe8] sm:$0xff]
  %v775 = vld [vmem:[%s9 + $0xf0] sm:$0xff]
  %v776 = vld [vmem:[%s9 + $0xf8] sm:$0xff]
  %v777 = vpack.c.bf16 %v746, %v745
  %v778 = vpack.c.bf16 %v748, %v747
  %v779 = vpack.c.bf16 %v750, %v749
  %v780 = vpack.c.bf16 %v752, %v751
  %v781 = vpack.c.bf16 %v754, %v753
  %v782 = vpack.c.bf16 %v756, %v755
  %v783 = vpack.c.bf16 %v758, %v757
  %v784 = vpack.c.bf16 %v760, %v759
  %v785 = vpack.c.bf16 %v762, %v761
  %v786 = vpack.c.bf16 %v764, %v763
  %v787 = vpack.c.bf16 %v766, %v765
  %v788 = vpack.c.bf16 %v768, %v767
  %v789 = vpack.c.bf16 %v770, %v769
  %v790 = vpack.c.bf16 %v772, %v771
  %v791 = vpack.c.bf16 %v774, %v773
  %v792 = vpack.c.bf16 %v776, %v775
  %v793 = vld [vmem:[%s10] sm:$0x1]
  %v795 = vlaneseq
  %v796 = vshrl.u32 %v795, 7
  %v797 = vsub.s32 0, %v796
  %v798 = vrot.slane %v793, %v797
  %800 = vmatprep.subr.bf16.mxu0 0
  %801 = vmatpush1.bf16.msra.mxu0 %v784
  %802 = vmatprep.subr.bf16.mxu0 0
  %803 = vmatpush1.bf16.msra.mxu0 %v783
  %804 = vmatprep.subr.bf16.mxu0 0
  %805 = vmatpush1.bf16.msra.mxu0 %v782
  %806 = vmatprep.subr.bf16.mxu0 0
  %807 = vmatpush1.bf16.msra.mxu0 %v781
  %808 = vmatprep.subr.bf16.mxu0 0
  %809 = vmatpush1.bf16.msra.mxu0 %v780
  %810 = vmatprep.subr.bf16.mxu0 0
  %811 = vmatpush1.bf16.msra.mxu0 %v779
  %812 = vmatprep.subr.bf16.mxu0 0
  %813 = vmatpush1.bf16.msra.mxu0 %v778
  %814 = vmatprep.subr.bf16.mxu0 0
  %815 = vmatpush1.bf16.msra.mxu0 %v777
  %816 = vmatprep.subr.bf16.mxu0 0
  %817 = vmatpush2.bf16.msra.mxu0 %v792
  %818 = vmatprep.subr.bf16.mxu0 0
  %819 = vmatpush2.bf16.msra.mxu0 %v791
  %820 = vmatprep.subr.bf16.mxu0 0
  %821 = vmatpush2.bf16.msra.mxu0 %v790
  %822 = vmatprep.subr.bf16.mxu0 0
  %823 = vmatpush2.bf16.msra.mxu0 %v789
  %824 = vmatprep.subr.bf16.mxu0 0
  %825 = vmatpush2.bf16.msra.mxu0 %v788
  %826 = vmatprep.subr.bf16.mxu0 0
  %827 = vmatpush2.bf16.msra.mxu0 %v787
  %828 = vmatprep.subr.bf16.mxu0 0
  %829 = vmatpush2.bf16.msra.mxu0 %v786
  %830 = vmatprep.subr.bf16.mxu0 0
  %831 = vmatpush2.bf16.msra.mxu0 %v785
  %832 = vmatprep.mubr.bf16.mxu0 %v744
  %833 = vmatmul.mubr.bf16.gmra.mxu0 %v743
  %v834 = vpop.f32.mrf.mxu0
  %v835 = vadd.f32 %v798, %v834
  %v836 = vpop.f32.mrf.mxu0
  %v837 = vpop.f32.mrf.mxu0
  %v838 = vpop.f32.mrf.mxu0
  %839 = vdwg.mxu0
  %840 = vst [vmem:[%s17] sm:$0xf] %v835
  %v841 = vpack.c.bf16 %v835, %v835
  %v842 = vld [vmem:[%s11] sm:$0xff]
  %v843 = vld [vmem:[%s11 + $0x8] sm:$0xff]
  %v844 = vld [vmem:[%s11 + $0x10] sm:$0xff]
  %v845 = vld [vmem:[%s11 + $0x18] sm:$0xff]
  %v846 = vld [vmem:[%s11 + $0x20] sm:$0xff]
  %v847 = vld [vmem:[%s11 + $0x28] sm:$0xff]
  %v848 = vld [vmem:[%s11 + $0x30] sm:$0xff]
  %v849 = vld [vmem:[%s11 + $0x38] sm:$0xff]
  %v850 = vld [vmem:[%s11 + $0x40] sm:$0xff]
  %v851 = vld [vmem:[%s11 + $0x48] sm:$0xff]
  %v852 = vld [vmem:[%s11 + $0x50] sm:$0xff]
  %v853 = vld [vmem:[%s11 + $0x58] sm:$0xff]
  %v854 = vld [vmem:[%s11 + $0x60] sm:$0xff]
  %v855 = vld [vmem:[%s11 + $0x68] sm:$0xff]
  %v856 = vld [vmem:[%s11 + $0x70] sm:$0xff]
  %v857 = vld [vmem:[%s11 + $0x78] sm:$0xff]
  %v858 = vld [vmem:[%s11 + $0x80] sm:$0xff]
  %v859 = vld [vmem:[%s11 + $0x88] sm:$0xff]
  %v860 = vld [vmem:[%s11 + $0x90] sm:$0xff]
  %v861 = vld [vmem:[%s11 + $0x98] sm:$0xff]
  %v862 = vld [vmem:[%s11 + $0xa0] sm:$0xff]
  %v863 = vld [vmem:[%s11 + $0xa8] sm:$0xff]
  %v864 = vld [vmem:[%s11 + $0xb0] sm:$0xff]
  %v865 = vld [vmem:[%s11 + $0xb8] sm:$0xff]
  %v866 = vld [vmem:[%s11 + $0xc0] sm:$0xff]
  %v867 = vld [vmem:[%s11 + $0xc8] sm:$0xff]
  %v868 = vld [vmem:[%s11 + $0xd0] sm:$0xff]
  %v869 = vld [vmem:[%s11 + $0xd8] sm:$0xff]
  %v870 = vld [vmem:[%s11 + $0xe0] sm:$0xff]
  %v871 = vld [vmem:[%s11 + $0xe8] sm:$0xff]
  %v872 = vld [vmem:[%s11 + $0xf0] sm:$0xff]
  %v873 = vld [vmem:[%s11 + $0xf8] sm:$0xff]
  %v874 = vpack.c.bf16 %v844, %v842
  %v875 = vpack.c.bf16 %v845, %v843
  %v876 = vpack.c.bf16 %v848, %v846
  %v877 = vpack.c.bf16 %v849, %v847
  %v878 = vpack.c.bf16 %v852, %v850
  %v879 = vpack.c.bf16 %v853, %v851
  %v880 = vpack.c.bf16 %v856, %v854
  %v881 = vpack.c.bf16 %v857, %v855
  %v882 = vpack.c.bf16 %v860, %v858
  %v883 = vpack.c.bf16 %v861, %v859
  %v884 = vpack.c.bf16 %v864, %v862
  %v885 = vpack.c.bf16 %v865, %v863
  %v886 = vpack.c.bf16 %v868, %v866
  %v887 = vpack.c.bf16 %v869, %v867
  %v888 = vpack.c.bf16 %v872, %v870
  %v889 = vpack.c.bf16 %v873, %v871
  %v890 = vld [vmem:[%s12] sm:$0x3]
  %v892 = vlaneseq
  %v893 = vshrl.u32 %v892, 7
  %v894 = vsub.s32 0, %v893
  %v895 = vrot.slane %v890, %v894
  %v896 = vlaneseq
  %v897 = vshrl.u32 %v896, 7
  %v898 = vsub.s32 1, %v897
  %v899 = vrot.slane %v890, %v898
  %902 = vmatprep.subr.bf16.mxu0 %v889
  %903 = vmatpush1.bf16.msra.mxu0 %v888
  %904 = vmatprep.subr.bf16.mxu0 %v887
  %905 = vmatpush1.bf16.msra.mxu0 %v886
  %906 = vmatprep.subr.bf16.mxu0 %v885
  %907 = vmatpush1.bf16.msra.mxu0 %v884
  %908 = vmatprep.subr.bf16.mxu0 %v883
  %909 = vmatpush1.bf16.msra.mxu0 %v882
  %910 = vmatprep.subr.bf16.mxu0 %v881
  %911 = vmatpush1.bf16.msra.mxu0 %v880
  %912 = vmatprep.subr.bf16.mxu0 %v879
  %913 = vmatpush1.bf16.msra.mxu0 %v878
  %914 = vmatprep.subr.bf16.mxu0 %v877
  %915 = vmatpush1.bf16.msra.mxu0 %v876
  %916 = vmatprep.subr.bf16.mxu0 %v875
  %917 = vmatpush1.bf16.msra.mxu0 %v874
  %918 = vmatprep.subr.bf16.mxu0 0
  %919 = vmatpush2.bf16.msra.mxu0 0
  %920 = vmatprep.subr.bf16.mxu0 0
  %921 = vmatpush2.bf16.msra.mxu0 0
  %922 = vmatprep.subr.bf16.mxu0 0
  %923 = vmatpush2.bf16.msra.mxu0 0
  %924 = vmatprep.subr.bf16.mxu0 0
  %925 = vmatpush2.bf16.msra.mxu0 0
  %926 = vmatprep.subr.bf16.mxu0 0
  %927 = vmatpush2.bf16.msra.mxu0 0
  %928 = vmatprep.subr.bf16.mxu0 0
  %929 = vmatpush2.bf16.msra.mxu0 0
  %930 = vmatprep.subr.bf16.mxu0 0
  %931 = vmatpush2.bf16.msra.mxu0 0
  %932 = vmatprep.subr.bf16.mxu0 0
  %933 = vmatpush2.bf16.msra.mxu0 0
  %934 = vmatprep.mubr.bf16.mxu0 0
  %935 = vmatmul.mubr.bf16.gmra.mxu0 %v841
  %v936 = vpop.f32.mrf.mxu0
  %v937 = vadd.f32 %v895, %v936
  %v938 = vpop.f32.mrf.mxu0
  %v939 = vadd.f32 %v899, %v938
  %v940 = vpop.f32.mrf.mxu0
  %v941 = vpop.f32.mrf.mxu0
  %942 = vdwg.mxu0
  %v944 = vsel %vm550, %v937, 0
  %v947 = vsel %vm550, %v939, 0
  %949 = vmatprep.subr.mxu0 0.0
  %950 = vmatpush1.msra.mxu0 0.0
  %951 = vmatprep.subr.mxu0 0.0
  %952 = vmatpush1.msra.mxu0 0.0
  %953 = vmatprep.subr.mxu0 0.0
  %954 = vmatpush1.msra.mxu0 0.0
  %955 = vmatprep.subr.mxu0 0.0
  %956 = vmatpush1.msra.mxu0 0.0
  %957 = vmatprep.subr.mxu0 0.0
  %958 = vmatpush1.msra.mxu0 0.0
  %959 = vmatprep.subr.mxu0 0.0
  %960 = vmatpush1.msra.mxu0 0.0
  %961 = vmatprep.subr.mxu0 0.0
  %962 = vmatpush1.msra.mxu0 0.0
  %963 = vmatprep.subr.mxu0 0.0
  %964 = vmatpush1.msra.mxu0 0.0
  %965 = vmatprep.subr.mxu0 0.0
  %966 = vmatpush1.msra.mxu0 0.0
  %967 = vmatprep.subr.mxu0 0.0
  %968 = vmatpush1.msra.mxu0 0.0
  %969 = vmatprep.subr.mxu0 0.0
  %970 = vmatpush1.msra.mxu0 0.0
  %971 = vmatprep.subr.mxu0 0.0
  %972 = vmatpush1.msra.mxu0 0.0
  %973 = vmatprep.subr.mxu0 0.0
  %974 = vmatpush1.msra.mxu0 0.0
  %975 = vmatprep.subr.mxu0 0.0
  %976 = vmatpush1.msra.mxu0 0.0
  %977 = vmatprep.subr.mxu0 0.0
  %978 = vmatpush1.msra.mxu0 0.0
  %979 = vmatprep.subr.mxu0 %v947
  %980 = vmatpush1.msra.mxu0 %v944
  %981 = vmatprep.subr.mxu0 0.0
  %982 = vmatpush2.msra.mxu0 0.0
  %983 = vmatprep.subr.mxu0 0.0
  %984 = vmatpush2.msra.mxu0 0.0
  %985 = vmatprep.subr.mxu0 0.0
  %986 = vmatpush2.msra.mxu0 0.0
  %987 = vmatprep.subr.mxu0 0.0
  %988 = vmatpush2.msra.mxu0 0.0
  %989 = vmatprep.subr.mxu0 0.0
  %990 = vmatpush2.msra.mxu0 0.0
  %991 = vmatprep.subr.mxu0 0.0
  %992 = vmatpush2.msra.mxu0 0.0
  %993 = vmatprep.subr.mxu0 0.0
  %994 = vmatpush2.msra.mxu0 0.0
  %995 = vmatprep.subr.mxu0 0.0
  %996 = vmatpush2.msra.mxu0 0.0
  %997 = vmatprep.subr.mxu0 0.0
  %998 = vmatpush2.msra.mxu0 0.0
  %999 = vmatprep.subr.mxu0 0.0
  %1000 = vmatpush2.msra.mxu0 0.0
  %1001 = vmatprep.subr.mxu0 0.0
  %1002 = vmatpush2.msra.mxu0 0.0
  %1003 = vmatprep.subr.mxu0 0.0
  %1004 = vmatpush2.msra.mxu0 0.0
  %1005 = vmatprep.subr.mxu0 0.0
  %1006 = vmatpush2.msra.mxu0 0.0
  %1007 = vmatprep.subr.mxu0 0.0
  %1008 = vmatpush2.msra.mxu0 0.0
  %1009 = vmatprep.subr.mxu0 0.0
  %1010 = vmatpush2.msra.mxu0 0.0
  %1011 = vmatprep.subr.mxu0 0.0
  %1012 = vmatpush2.msra.mxu0 0.0
  %1013 = vmatprep.mubr.f32.mxu0 0.0
  %1014 = vmatmul.mubr.f32.gmra.mxu0 %v548
  %v1015 = vpop.f32.mrf.mxu0
  %v1016 = vadd.f32 0.0, %v1015
  %v1017 = vpop.f32.mrf.mxu0
  %v1018 = vadd.f32 0.0, %v1017
  %1019 = vdwg.mxu0
  %v1020 = vsub.f32 %v937, %v1016
  %v1021 = vsub.f32 %v939, %v1018
  %v1022 = vmul.f32 %v1020, %v1020
  %v1023 = vmul.f32 %v1021, %v1021
  %v1025 = vsel %vm550, %v1022, 0
  %v1028 = vsel %vm550, %v1023, 0
  %1030 = vmatprep.subr.mxu0 0.0
  %1031 = vmatpush1.msra.mxu0 0.0
  %1032 = vmatprep.subr.mxu0 0.0
  %1033 = vmatpush1.msra.mxu0 0.0
  %1034 = vmatprep.subr.mxu0 0.0
  %1035 = vmatpush1.msra.mxu0 0.0
  %1036 = vmatprep.subr.mxu0 0.0
  %1037 = vmatpush1.msra.mxu0 0.0
  %1038 = vmatprep.subr.mxu0 0.0
  %1039 = vmatpush1.msra.mxu0 0.0
  %1040 = vmatprep.subr.mxu0 0.0
  %1041 = vmatpush1.msra.mxu0 0.0
  %1042 = vmatprep.subr.mxu0 0.0
  %1043 = vmatpush1.msra.mxu0 0.0
  %1044 = vmatprep.subr.mxu0 0.0
  %1045 = vmatpush1.msra.mxu0 0.0
  %1046 = vmatprep.subr.mxu0 0.0
  %1047 = vmatpush1.msra.mxu0 0.0
  %1048 = vmatprep.subr.mxu0 0.0
  %1049 = vmatpush1.msra.mxu0 0.0
  %1050 = vmatprep.subr.mxu0 0.0
  %1051 = vmatpush1.msra.mxu0 0.0
  %1052 = vmatprep.subr.mxu0 0.0
  %1053 = vmatpush1.msra.mxu0 0.0
  %1054 = vmatprep.subr.mxu0 0.0
  %1055 = vmatpush1.msra.mxu0 0.0
  %1056 = vmatprep.subr.mxu0 0.0
  %1057 = vmatpush1.msra.mxu0 0.0
  %1058 = vmatprep.subr.mxu0 0.0
  %1059 = vmatpush1.msra.mxu0 0.0
  %1060 = vmatprep.subr.mxu0 %v1028
  %1061 = vmatpush1.msra.mxu0 %v1025
  %1062 = vmatprep.subr.mxu0 0.0
  %1063 = vmatpush2.msra.mxu0 0.0
  %1064 = vmatprep.subr.mxu0 0.0
  %1065 = vmatpush2.msra.mxu0 0.0
  %1066 = vmatprep.subr.mxu0 0.0
  %1067 = vmatpush2.msra.mxu0 0.0
  %1068 = vmatprep.subr.mxu0 0.0
  %1069 = vmatpush2.msra.mxu0 0.0
  %1070 = vmatprep.subr.mxu0 0.0
  %1071 = vmatpush2.msra.mxu0 0.0
  %1072 = vmatprep.subr.mxu0 0.0
  %1073 = vmatpush2.msra.mxu0 0.0
  %1074 = vmatprep.subr.mxu0 0.0
  %1075 = vmatpush2.msra.mxu0 0.0
  %1076 = vmatprep.subr.mxu0 0.0
  %1077 = vmatpush2.msra.mxu0 0.0
  %1078 = vmatprep.subr.mxu0 0.0
  %1079 = vmatpush2.msra.mxu0 0.0
  %1080 = vmatprep.subr.mxu0 0.0
  %1081 = vmatpush2.msra.mxu0 0.0
  %1082 = vmatprep.subr.mxu0 0.0
  %1083 = vmatpush2.msra.mxu0 0.0
  %1084 = vmatprep.subr.mxu0 0.0
  %1085 = vmatpush2.msra.mxu0 0.0
  %1086 = vmatprep.subr.mxu0 0.0
  %1087 = vmatpush2.msra.mxu0 0.0
  %1088 = vmatprep.subr.mxu0 0.0
  %1089 = vmatpush2.msra.mxu0 0.0
  %1090 = vmatprep.subr.mxu0 0.0
  %1091 = vmatpush2.msra.mxu0 0.0
  %1092 = vmatprep.subr.mxu0 0.0
  %1093 = vmatpush2.msra.mxu0 0.0
  %1094 = vmatprep.mubr.f32.mxu0 0.0
  %1095 = vmatmul.mubr.f32.gmra.mxu0 %v548
  %v1096 = vpop.f32.mrf.mxu0
  %v1097 = vadd.f32 1e-05, %v1096
  %v1098 = vpop.f32.mrf.mxu0
  %v1099 = vadd.f32 1e-05, %v1098
  %1100 = vdwg.mxu0
  %v1101 = vrsqrt.pop %v1097
  %v1102 = vrsqrt.pop %v1099
  %v1103 = vmul.f32 %v1020, %v1101
  %v1104 = vmul.f32 %v1021, %v1102
  %v1105 = vld [vmem:[%s13] sm:$0x3]
  %v1107 = vlaneseq
  %v1108 = vshrl.u32 %v1107, 7
  %v1109 = vsub.s32 0, %v1108
  %v1110 = vrot.slane %v1105, %v1109
  %v1111 = vlaneseq
  %v1112 = vshrl.u32 %v1111, 7
  %v1113 = vsub.s32 1, %v1112
  %v1114 = vrot.slane %v1105, %v1113
  %v1117 = vmul.f32 %v1103, %v1110
  %v1118 = vmul.f32 %v1104, %v1114
  %v1119 = vld [vmem:[%s14] sm:$0x3]
  %v1121 = vlaneseq
  %v1122 = vshrl.u32 %v1121, 7
  %v1123 = vsub.s32 0, %v1122
  %v1124 = vrot.slane %v1119, %v1123
  %v1125 = vlaneseq
  %v1126 = vshrl.u32 %v1125, 7
  %v1127 = vsub.s32 1, %v1126
  %v1128 = vrot.slane %v1119, %v1127
  %v1131 = vadd.f32 %v1117, %v1124
  %v1132 = vadd.f32 %v1118, %v1128
  %v1133 = vmax.f32 %v1131, 0.0
  %v1134 = vmax.f32 %v1132, 0.0
  %v1135 = vpack.c.bf16 %v1133, %v1133
  %v1136 = vpack.c.bf16 %v1134, %v1134
  %v1137 = vld [vmem:[%s15] sm:$0xff]
  %v1138 = vld [vmem:[%s15 + $0x8] sm:$0xff]
  %v1139 = vld [vmem:[%s15 + $0x10] sm:$0xff]
  %v1140 = vld [vmem:[%s15 + $0x18] sm:$0xff]
  %v1141 = vld [vmem:[%s15 + $0x20] sm:$0xff]
  %v1142 = vld [vmem:[%s15 + $0x28] sm:$0xff]
  %v1143 = vld [vmem:[%s15 + $0x30] sm:$0xff]
  %v1144 = vld [vmem:[%s15 + $0x38] sm:$0xff]
  %v1145 = vld [vmem:[%s15 + $0x40] sm:$0xff]
  %v1146 = vld [vmem:[%s15 + $0x48] sm:$0xff]
  %v1147 = vld [vmem:[%s15 + $0x50] sm:$0xff]
  %v1148 = vld [vmem:[%s15 + $0x58] sm:$0xff]
  %v1149 = vld [vmem:[%s15 + $0x60] sm:$0xff]
  %v1150 = vld [vmem:[%s15 + $0x68] sm:$0xff]
  %v1151 = vld [vmem:[%s15 + $0x70] sm:$0xff]
  %v1152 = vld [vmem:[%s15 + $0x78] sm:$0xff]
  %v1153 = vld [vmem:[%s15 + $0x80] sm:$0xff]
  %v1154 = vld [vmem:[%s15 + $0x88] sm:$0xff]
  %v1155 = vld [vmem:[%s15 + $0x90] sm:$0xff]
  %v1156 = vld [vmem:[%s15 + $0x98] sm:$0xff]
  %v1157 = vld [vmem:[%s15 + $0xa0] sm:$0xff]
  %v1158 = vld [vmem:[%s15 + $0xa8] sm:$0xff]
  %v1159 = vld [vmem:[%s15 + $0xb0] sm:$0xff]
  %v1160 = vld [vmem:[%s15 + $0xb8] sm:$0xff]
  %v1161 = vld [vmem:[%s15 + $0xc0] sm:$0xff]
  %v1162 = vld [vmem:[%s15 + $0xc8] sm:$0xff]
  %v1163 = vld [vmem:[%s15 + $0xd0] sm:$0xff]
  %v1164 = vld [vmem:[%s15 + $0xd8] sm:$0xff]
  %v1165 = vld [vmem:[%s15 + $0xe0] sm:$0xff]
  %v1166 = vld [vmem:[%s15 + $0xe8] sm:$0xff]
  %v1167 = vld [vmem:[%s15 + $0xf0] sm:$0xff]
  %v1168 = vld [vmem:[%s15 + $0xf8] sm:$0xff]
  %v1169 = vpack.c.bf16 %v1138, %v1137
  %v1170 = vpack.c.bf16 %v1140, %v1139
  %v1171 = vpack.c.bf16 %v1142, %v1141
  %v1172 = vpack.c.bf16 %v1144, %v1143
  %v1173 = vpack.c.bf16 %v1146, %v1145
  %v1174 = vpack.c.bf16 %v1148, %v1147
  %v1175 = vpack.c.bf16 %v1150, %v1149
  %v1176 = vpack.c.bf16 %v1152, %v1151
  %v1177 = vpack.c.bf16 %v1154, %v1153
  %v1178 = vpack.c.bf16 %v1156, %v1155
  %v1179 = vpack.c.bf16 %v1158, %v1157
  %v1180 = vpack.c.bf16 %v1160, %v1159
  %v1181 = vpack.c.bf16 %v1162, %v1161
  %v1182 = vpack.c.bf16 %v1164, %v1163
  %v1183 = vpack.c.bf16 %v1166, %v1165
  %v1184 = vpack.c.bf16 %v1168, %v1167
  %v1185 = vld [vmem:[%s16] sm:$0x1]
  %v1187 = vlaneseq
  %v1188 = vshrl.u32 %v1187, 7
  %v1189 = vsub.s32 0, %v1188
  %v1190 = vrot.slane %v1185, %v1189
  %1192 = vmatprep.subr.bf16.mxu0 0
  %1193 = vmatpush1.bf16.msra.mxu0 %v1176
  %1194 = vmatprep.subr.bf16.mxu0 0
  %1195 = vmatpush1.bf16.msra.mxu0 %v1175
  %1196 = vmatprep.subr.bf16.mxu0 0
  %1197 = vmatpush1.bf16.msra.mxu0 %v1174
  %1198 = vmatprep.subr.bf16.mxu0 0
  %1199 = vmatpush1.bf16.msra.mxu0 %v1173
  %1200 = vmatprep.subr.bf16.mxu0 0
  %1201 = vmatpush1.bf16.msra.mxu0 %v1172
  %1202 = vmatprep.subr.bf16.mxu0 0
  %1203 = vmatpush1.bf16.msra.mxu0 %v1171
  %1204 = vmatprep.subr.bf16.mxu0 0
  %1205 = vmatpush1.bf16.msra.mxu0 %v1170
  %1206 = vmatprep.subr.bf16.mxu0 0
  %1207 = vmatpush1.bf16.msra.mxu0 %v1169
  %1208 = vmatprep.subr.bf16.mxu0 0
  %1209 = vmatpush2.bf16.msra.mxu0 %v1184
  %1210 = vmatprep.subr.bf16.mxu0 0
  %1211 = vmatpush2.bf16.msra.mxu0 %v1183
  %1212 = vmatprep.subr.bf16.mxu0 0
  %1213 = vmatpush2.bf16.msra.mxu0 %v1182
  %1214 = vmatprep.subr.bf16.mxu0 0
  %1215 = vmatpush2.bf16.msra.mxu0 %v1181
  %1216 = vmatprep.subr.bf16.mxu0 0
  %1217 = vmatpush2.bf16.msra.mxu0 %v1180
  %1218 = vmatprep.subr.bf16.mxu0 0
  %1219 = vmatpush2.bf16.msra.mxu0 %v1179
  %1220 = vmatprep.subr.bf16.mxu0 0
  %1221 = vmatpush2.bf16.msra.mxu0 %v1178
  %1222 = vmatprep.subr.bf16.mxu0 0
  %1223 = vmatpush2.bf16.msra.mxu0 %v1177
  %1224 = vmatprep.mubr.bf16.mxu0 %v1136
  %1225 = vmatmul.mubr.bf16.gmra.mxu0 %v1135
  %v1226 = vpop.f32.mrf.mxu0
  %v1227 = vadd.f32 %v1190, %v1226
  %v1228 = vpop.f32.mrf.mxu0
  %v1229 = vpop.f32.mrf.mxu0
  %v1230 = vpop.f32.mrf.mxu0
  %1231 = vdwg.mxu0
  %1232 = vst [vmem:[%s18] sm:$0xf] %v1227
  // Predicated region
  $region70: #{byol_forward.1} parent=0 // pred_check
    _
  $region71: #{byol_forward.1} parent=0 // pred_check_branch
    %1234 = sbr.rel (0) target = $region73
  $region72: #{byol_forward.1} parent=0 // pred_region
    _
  $region73: #{byol_forward.1} parent=0 // pred_fallthru
    _
  // Predicated region
  $region74: #{byol_forward.1} parent=0 // pred_check
    _
  $region75: #{byol_forward.1} parent=0 // pred_check_branch
    %1236 = sbr.rel (0) target = $region77
  $region76: #{byol_forward.1} parent=0 // pred_region
    _
  $region77: #{byol_forward.1} parent=0 // pred_fallthru
    _
  // Predicated region
  $region78: #{byol_forward.1} parent=0 // pred_check
    _
  $region79: #{byol_forward.1} parent=0 // pred_check_branch
    %1238 = sbr.rel (0) target = $region81
  $region80: #{byol_forward.1} parent=0 // pred_region
    _
  $region81: #{byol_forward.1} parent=0 // pred_fallthru
    _
  // Predicated region
  $region82: #{byol_forward.1} parent=0 // pred_check
    _
  $region83: #{byol_forward.1} parent=0 // pred_check_branch
    %1240 = sbr.rel (0) target = $region85
  $region84: #{byol_forward.1} parent=0 // pred_region
    _
  $region85: #{byol_forward.1} parent=0 // pred_fallthru
    _

</llo_original>
